<compile_context>
chip_gen: v5e
topology: v5e:2x2
jax: 0.10.0
libtpu: 0.0.40
codegen_flags: <defaults>
</compile_context>

<pallas_src>
import jax
import jax.numpy as jnp
from jax.experimental import pallas as pl
from jax.experimental.pallas import tpu as pltpu


def _round_up(x, m):
    return ((x + m - 1) // m) * m


def gcn_layer_kernel(adj_ref, h_ref, w_ref, b_ref, out_ref, acc_ref, rowsum_ref):
    # adj (bt,tm,tk) f32 | h (bt,tk,Hp) bf16 | w (Hp,Hp) bf16 | b (1,Hp) f32
    k = pl.program_id(2)

    @pl.when(k == 0)
    def _init():
        acc_ref[...] = jnp.zeros_like(acc_ref)
        rowsum_ref[...] = jnp.zeros_like(rowsum_ref)

    adj = adj_ref[...]                                        # (bt, tm, tk) f32

    # Exact f32 row sums (matches torch adj.sum(-1)), accumulated over K tiles.
    rowsum_ref[...] += jnp.sum(adj, axis=-1, keepdims=True)

    # Aggregation matmul: bf16 operands, f32 accumulation (normalization deferred).
    acc_ref[...] += jnp.einsum(
        "bmk,bkh->bmh", adj.astype(h_ref.dtype), h_ref[...],
        preferred_element_type=jnp.float32)

    @pl.when(k == pl.num_programs(2) - 1)
    def _finalize():
        bt, tm, hp = acc_ref.shape
        scale = rowsum_ref[...]                               # (bt, tm, 1) f32
        inv = pl.reciprocal(jnp.where(scale == 0.0, 1.0, scale), approx=True)
        agg = acc_ref[...] * inv                              # (bt, tm, Hp) f32

        # Linear layer on the MXU: (bt*tm, Hp) @ (Hp, Hp), f32 accumulation.
        agg2 = agg.reshape(bt * tm, hp).astype(w_ref.dtype)
        lin = jnp.dot(agg2, w_ref[...], preferred_element_type=jnp.float32)
        lin = lin + b_ref[...]                                # (1, Hp) broadcast
        out_ref[...] = jnp.maximum(lin, 0.0).reshape(bt, tm, hp)


def gcn_layer(adj, nodes_hidden, nodes_mask, weight, bias,
              compute_dtype=jnp.bfloat16):
    """adj: [B,N,N] f32, nodes_hidden: [B,N,H] f32, nodes_mask: [B,N] f32,
    weight: [H,H] (PyTorch nn.Linear layout [out,in]), bias: [H] f32."""
    B, N, H = nodes_hidden.shape
    adj = adj.astype(jnp.float32)

    # --- tiling decisions ---------------------------------------------------
    MAX_FULL_N = 512
    if N <= MAX_FULL_N:
        tile_n, Np = N, N
    else:
        tile_n = 256                       # multiple of 128: fine on v5e/v6e/v7x
        Np = _round_up(N, tile_n)
    Hp = H if H % 128 == 0 else _round_up(H, 128)   # lane-dense feature/output dim

    # Fold several batches per grid step when the graph is tiny.
    if N >= 128:
        bt = 1
    else:
        cap = max(1, 256 // max(N, 1))
        bt = 1
        for d in range(1, B + 1):
            if B % d == 0 and d <= cap:
                bt = d

    # --- wrapper-side prep (cheap elementwise / pads, fused by XLA) ----------
    h = nodes_hidden * nodes_mask[..., None].astype(nodes_hidden.dtype)
    h = h.astype(compute_dtype)
    w_t = weight.T.astype(compute_dtype)             # [H_in, H_out]
    b2 = bias.reshape(1, H).astype(jnp.float32)

    if Np > N or Hp > H:
        h = jnp.pad(h, ((0, 0), (0, Np - N), (0, Hp - H)))
    if Np > N:
        adj = jnp.pad(adj, ((0, 0), (0, Np - N), (0, Np - N)))
    if Hp > H:
        w_t = jnp.pad(w_t, ((0, Hp - H), (0, Hp - H)))
        b2 = jnp.pad(b2, ((0, 0), (0, Hp - H)))

    grid = (B // bt, Np // tile_n, Np // tile_n)

    # VMEM budget: double-buffered blocks + resident params + scratch (+2x headroom).
    cbytes = jnp.dtype(compute_dtype).itemsize
    est = 2 * bt * tile_n * (tile_n * 4 + Hp * cbytes + Hp * 4)
    est += 2 * (Hp * Hp * cbytes + Hp * 4)
    est += bt * tile_n * (Hp * 4 + 128 * 4)
    vmem_limit = int(min(max(2 * est, 16 * 1024 * 1024), 64 * 1024 * 1024))

    out = pl.pallas_call(
        gcn_layer_kernel,
        out_shape=jax.ShapeDtypeStruct((B, Np, Hp), jnp.float32),
        grid_spec=pltpu.PrefetchScalarGridSpec(
            num_scalar_prefetch=0,
            grid=grid,
            in_specs=[
                pl.BlockSpec((bt, tile_n, tile_n), lambda b, i, k: (b, i, k)),
                pl.BlockSpec((bt, tile_n, Hp), lambda b, i, k: (b, k, 0)),
                pl.BlockSpec((Hp, Hp), lambda b, i, k: (0, 0)),
                pl.BlockSpec((1, Hp), lambda b, i, k: (0, 0)),
            ],
            out_specs=pl.BlockSpec((bt, tile_n, Hp), lambda b, i, k: (b, i, 0)),
            scratch_shapes=[
                pltpu.VMEM((bt, tile_n, Hp), jnp.float32),   # aggregation accumulator
                pltpu.VMEM((bt, tile_n, 1), jnp.float32),    # row-sum accumulator
            ],
        ),
        compiler_params=pltpu.CompilerParams(
            dimension_semantics=("parallel", "parallel", "arbitrary"),
            vmem_limit_bytes=vmem_limit,
        ),
    )(adj, h, w_t, b2)

    if Np > N or Hp > H:
        out = out[:, :N, :H]
    return out


def gcn_layer_ref(adj, nodes_hidden, nodes_mask, weight, bias):
    scale = adj.sum(-1)
    scale = jnp.where(scale == 0.0, 1.0, scale)
    adj_n = adj / scale[..., None]
    h = nodes_hidden * nodes_mask[..., None]
    out = jnp.einsum("bnm,bmh->bnh", adj_n, h) @ weight.T + bias
    return jnp.maximum(out, 0.0)


if __name__ == "__main__":
    B, N, H = 2, 8, 32  # batch, num nodes, hidden_size

    key = jax.random.PRNGKey(0)
    k_adj, k_nodes, k_mask, k_w, k_b = jax.random.split(key, 5)

    # Deterministic synthetic inputs.
    adj = (jax.random.uniform(k_adj, (B, N, N)) > 0.5).astype(jnp.float32)
    adj = adj.at[:, 0, :].set(0.0)  # exercise the scale==0 -> 1 branch
    nodes_hidden = jax.random.normal(k_nodes, (B, N, H), dtype=jnp.float32)
    nodes_mask = (jax.random.uniform(k_mask, (B, N)) > 0.3).astype(jnp.float32)

    # Deterministic nn.Linear(hidden_size, hidden_size) parameters.
    bound = 1.0 / (H ** 0.5)
    weight = jax.random.uniform(k_w, (H, H), minval=-bound, maxval=bound,
                                dtype=jnp.float32)
    bias = jax.random.uniform(k_b, (H,), minval=-bound, maxval=bound,
                              dtype=jnp.float32)

    out = gcn_layer(adj, nodes_hidden, nodes_mask, weight, bias)
    out = jax.block_until_ready(out)

    ref = gcn_layer_ref(adj, nodes_hidden, nodes_mask, weight, bias)
    assert out.shape == (B, N, H)
    # bf16 MXU operands + approx reciprocal -> relaxed tolerance vs f32 reference.
    assert jnp.allclose(out, ref, atol=2e-2, rtol=2e-2)

    print("KERNEL_OK")
</pallas_src>

<mosaic_0001>
module attributes {stable_mosaic.version = 11 : i64} {
  func.func @gcn_layer_kernel(%arg0: i32, %arg1: i32, %arg2: i32, %arg3: memref<2x8x8xf32, #tpu.memory_space<vmem>>, %arg4: memref<2x8x128xbf16, #tpu.memory_space<vmem>>, %arg5: memref<128x128xbf16, #tpu.memory_space<vmem>>, %arg6: memref<1x128xf32, #tpu.memory_space<vmem>>, %arg7: memref<2x8x128xf32, #tpu.memory_space<vmem>>, %arg8: memref<2x8x128xf32, #tpu.memory_space<vmem>>, %arg9: memref<2x8x1xf32, #tpu.memory_space<vmem>>) attributes {dimension_semantics = [#tpu.dimension_semantics<parallel>, #tpu.dimension_semantics<parallel>, #tpu.dimension_semantics<arbitrary>], iteration_bounds = array<i64: 1, 1, 1>, scalar_prefetch = 0 : i64, scratch_operands = 2 : i64, tpu.core_type = #tpu.core_type<tc>, window_params = [{transform_indices = @transform_0, window_bounds = array<i64: 2, 8, 8>}, {transform_indices = @transform_1, window_bounds = array<i64: 2, 8, 128>}, {pipeline_mode = #tpu.pipeline_mode<synchronous>, transform_indices = @transform_2, window_bounds = array<i64: 128, 128>}, {pipeline_mode = #tpu.pipeline_mode<synchronous>, transform_indices = @transform_3, window_bounds = array<i64: 1, 128>}, {transform_indices = @transform_4, window_bounds = array<i64: 2, 8, 128>}]} {
    %c0_i32 = arith.constant 0 : i32
    %0 = arith.cmpi eq, %arg2, %c0_i32 : i32
    %1 = arith.extui %0 : i1 to i32
    %c0_i32_0 = arith.constant 0 : i32
    %2 = arith.cmpi ne, %1, %c0_i32_0 : i32
    scf.if %2 {
      %cst_21 = arith.constant 0.000000e+00 : f32
      %18 = vector.broadcast %cst_21 : f32 to vector<2x8x128xf32>
      %c0_22 = arith.constant 0 : index
      %c0_23 = arith.constant 0 : index
      %c0_24 = arith.constant 0 : index
      %19 = vector.load %arg8[%c0_22, %c0_23, %c0_24] : memref<2x8x128xf32, #tpu.memory_space<vmem>>, vector<2x8x128xf32>
      tpu.vector_store %arg8[%c0_22, %c0_23, %c0_24], %18 {strides = array<i32>} : memref<2x8x128xf32, #tpu.memory_space<vmem>>, vector<2x8x128xf32>,
      %cst_25 = arith.constant 0.000000e+00 : f32
      %20 = vector.broadcast %cst_25 : f32 to vector<2x8x1xf32>
      %c0_26 = arith.constant 0 : index
      %c0_27 = arith.constant 0 : index
      %c0_28 = arith.constant 0 : index
      %21 = vector.load %arg9[%c0_26, %c0_27, %c0_28] : memref<2x8x1xf32, #tpu.memory_space<vmem>>, vector<2x8x1xf32>
      tpu.vector_store %arg9[%c0_26, %c0_27, %c0_28], %20 {strides = array<i32>} : memref<2x8x1xf32, #tpu.memory_space<vmem>>, vector<2x8x1xf32>,
    } else {
    }
    %c0 = arith.constant 0 : index
    %c0_1 = arith.constant 0 : index
    %c0_2 = arith.constant 0 : index
    %3 = vector.load %arg3[%c0, %c0_1, %c0_2] : memref<2x8x8xf32, #tpu.memory_space<vmem>>, vector<2x8x8xf32>
    %c0_3 = arith.constant 0 : index
    %c0_4 = arith.constant 0 : index
    %c0_5 = arith.constant 0 : index
    %4 = vector.load %arg9[%c0_3, %c0_4, %c0_5] : memref<2x8x1xf32, #tpu.memory_space<vmem>>, vector<2x8x1xf32>
    %cst = arith.constant dense<0.000000e+00> : vector<2x8xf32>
    %5 = vector.multi_reduction <add>, %3, %cst [2] : vector<2x8x8xf32> to vector<2x8xf32>
    %6 = vector.shape_cast %5 : vector<2x8xf32> to vector<2x8x1xf32>
    %7 = arith.addf %4, %6 : vector<2x8x1xf32>
    %c0_6 = arith.constant 0 : index
    %c0_7 = arith.constant 0 : index
    %c0_8 = arith.constant 0 : index
    %8 = vector.load %arg9[%c0_6, %c0_7, %c0_8] : memref<2x8x1xf32, #tpu.memory_space<vmem>>, vector<2x8x1xf32>
    tpu.vector_store %arg9[%c0_6, %c0_7, %c0_8], %7 {strides = array<i32>} : memref<2x8x1xf32, #tpu.memory_space<vmem>>, vector<2x8x1xf32>,
    %c0_9 = arith.constant 0 : index
    %c0_10 = arith.constant 0 : index
    %c0_11 = arith.constant 0 : index
    %9 = vector.load %arg8[%c0_9, %c0_10, %c0_11] : memref<2x8x128xf32, #tpu.memory_space<vmem>>, vector<2x8x128xf32>
    %10 = arith.truncf %3 : vector<2x8x8xf32> to vector<2x8x8xbf16>
    %c0_12 = arith.constant 0 : index
    %c0_13 = arith.constant 0 : index
    %c0_14 = arith.constant 0 : index
    %11 = vector.load %arg4[%c0_12, %c0_13, %c0_14] : memref<2x8x128xbf16, #tpu.memory_space<vmem>>, vector<2x8x128xbf16>
    "tpu.trace_start"() <{level = 10 : i32, message = "bmk,bkh->bmh"}> : () -> ()
    %cst_15 = arith.constant dense<0.000000e+00> : vector<2x8x128xf32>
    %12 = tpu.matmul %10, %11, %cst_15 {dimension_numbers = #tpu.dot_dimension_numbers<[2], [1], [1], [2], [0, 0, 0, 1, 1, 2], [0], [0]>} : vector<2x8x8xbf16>, vector<2x8x128xbf16>, vector<2x8x128xf32> -> vector<2x8x128xf32>
    "tpu.trace_stop"() : () -> ()
    %13 = arith.addf %9, %12 : vector<2x8x128xf32>
    %c0_16 = arith.constant 0 : index
    %c0_17 = arith.constant 0 : index
    %c0_18 = arith.constant 0 : index
    %14 = vector.load %arg8[%c0_16, %c0_17, %c0_18] : memref<2x8x128xf32, #tpu.memory_space<vmem>>, vector<2x8x128xf32>
    tpu.vector_store %arg8[%c0_16, %c0_17, %c0_18], %13 {strides = array<i32>} : memref<2x8x128xf32, #tpu.memory_space<vmem>>, vector<2x8x128xf32>,
    %c0_i32_19 = arith.constant 0 : i32
    %15 = arith.cmpi eq, %arg2, %c0_i32_19 : i32
    %16 = arith.extui %15 : i1 to i32
    %c0_i32_20 = arith.constant 0 : i32
    %17 = arith.cmpi ne, %16, %c0_i32_20 : i32
    scf.if %17 {
      %c0_21 = arith.constant 0 : index
      %c0_22 = arith.constant 0 : index
      %c0_23 = arith.constant 0 : index
      %18 = vector.load %arg9[%c0_21, %c0_22, %c0_23] : memref<2x8x1xf32, #tpu.memory_space<vmem>>, vector<2x8x1xf32>
      %cst_24 = arith.constant 0.000000e+00 : f32
      %19 = vector.broadcast %cst_24 : f32 to vector<2x8x1xf32>
      %20 = arith.cmpf oeq, %18, %19 : vector<2x8x1xf32>
      %cst_25 = arith.constant 1.000000e+00 : f32
      %21 = vector.broadcast %cst_25 : f32 to vector<2x8x1xf32>
      %22 = arith.select %20, %21, %18 : vector<2x8x1xi1>, vector<2x8x1xf32>
      %23 = tpu.reciprocal %22 {approx = true} : vector<2x8x1xf32> -> vector<2x8x1xf32>
      %c0_26 = arith.constant 0 : index
      %c0_27 = arith.constant 0 : index
      %c0_28 = arith.constant 0 : index
      %24 = vector.load %arg8[%c0_26, %c0_27, %c0_28] : memref<2x8x128xf32, #tpu.memory_space<vmem>>, vector<2x8x128xf32>
      %25 = vector.broadcast %23 : vector<2x8x1xf32> to vector<2x8x128xf32>
      %26 = arith.mulf %24, %25 : vector<2x8x128xf32>
      %27 = vector.shape_cast %26 : vector<2x8x128xf32> to vector<16x128xf32>
      %28 = arith.truncf %27 : vector<16x128xf32> to vector<16x128xbf16>
      %c0_29 = arith.constant 0 : index
      %c0_30 = arith.constant 0 : index
      %29 = vector.load %arg5[%c0_29, %c0_30] : memref<128x128xbf16, #tpu.memory_space<vmem>>, vector<128x128xbf16>
      %cst_31 = arith.constant dense<0.000000e+00> : vector<16x128xf32>
      %30 = tpu.matmul %28, %29, %cst_31 {dimension_numbers = #tpu.dot_dimension_numbers<[1], [0], [0], [1], [0, 0, 1, 1], [], []>} : vector<16x128xbf16>, vector<128x128xbf16>, vector<16x128xf32> -> vector<16x128xf32>
      %c0_32 = arith.constant 0 : index
      %c0_33 = arith.constant 0 : index
      %31 = vector.load %arg6[%c0_32, %c0_33] : memref<1x128xf32, #tpu.memory_space<vmem>>, vector<1x128xf32>
      %32 = vector.broadcast %31 : vector<1x128xf32> to vector<16x128xf32>
      %33 = arith.addf %30, %32 : vector<16x128xf32>
      %cst_34 = arith.constant 0.000000e+00 : f32
      %34 = vector.broadcast %cst_34 : f32 to vector<16x128xf32>
      %35 = arith.maximumf %33, %34 : vector<16x128xf32>
      %36 = vector.shape_cast %35 : vector<16x128xf32> to vector<2x8x128xf32>
      %c0_35 = arith.constant 0 : index
      %c0_36 = arith.constant 0 : index
      %c0_37 = arith.constant 0 : index
      %37 = vector.load %arg7[%c0_35, %c0_36, %c0_37] : memref<2x8x128xf32, #tpu.memory_space<vmem>>, vector<2x8x128xf32>
      tpu.vector_store %arg7[%c0_35, %c0_36, %c0_37], %36 {strides = array<i32>} : memref<2x8x128xf32, #tpu.memory_space<vmem>>, vector<2x8x128xf32>,
    } else {
    }
    return
  }
  func.func @transform_0(%arg0: i32, %arg1: i32, %arg2: i32) -> (i32, i32, i32) {
    %c0_i32 = arith.constant 0 : i32
    return %arg0, %arg1, %arg2 : i32, i32, i32
  }
  func.func @transform_1(%arg0: i32, %arg1: i32, %arg2: i32) -> (i32, i32, i32) {
    %c0_i32 = arith.constant 0 : i32
    %c0_i32_0 = arith.constant 0 : i32
    return %arg0, %arg2, %c0_i32 : i32, i32, i32
  }
  func.func @transform_2(%arg0: i32, %arg1: i32, %arg2: i32) -> (i32, i32) {
    %c0_i32 = arith.constant 0 : i32
    %c0_i32_0 = arith.constant 0 : i32
    %c0_i32_1 = arith.constant 0 : i32
    return %c0_i32, %c0_i32_0 : i32, i32
  }
  func.func @transform_3(%arg0: i32, %arg1: i32, %arg2: i32) -> (i32, i32) {
    %c0_i32 = arith.constant 0 : i32
    %c0_i32_0 = arith.constant 0 : i32
    %c0_i32_1 = arith.constant 0 : i32
    return %c0_i32, %c0_i32_0 : i32, i32
  }
  func.func @transform_4(%arg0: i32, %arg1: i32, %arg2: i32) -> (i32, i32, i32) {
    %c0_i32 = arith.constant 0 : i32
    %c0_i32_0 = arith.constant 0 : i32
    return %arg0, %arg1, %c0_i32 : i32, i32, i32
  }
}

</mosaic_0001>

<llo_original>
// kernel: tpu_custom_call.1
$region0: #{tpu_custom_call.1}
  #allocation0 [shape = 'u32[]', space=smem, size = 0x4, offset = 0x4, fixed_abs, tag = 'smem constant byte address 0x4 - core index']
  #allocation1 [shape = 'u32[72,128]{1,0:T(1,128)}', space=vmem, size = 0x9000, scoped, tag = 'internal scratch']
  #allocation2 [shape = 'f32[2,8,128]{2,1,0:T(8,128)}', space=vmem, size = 0x2000, scoped, tag = 'scratch operand']
  #allocation3 [shape = 'f32[2,8,1]{2,1,0:T(8,128)}', space=vmem, size = 0x2000, scoped, tag = 'scratch operand']
  %s0 = inlined_call_operand.hbm [shape: f32[2,8,8], index: 0, kind: input, shape index: {}]
  %s1 = inlined_call_operand.hbm [shape: bf16[2,8,128], index: 1, kind: input, shape index: {}]
  %s2 = inlined_call_operand.hbm [shape: bf16[128,128], index: 2, kind: input, shape index: {}]
  %s3 = inlined_call_operand.vmem [shape: f32[1,128], index: 3, kind: input, shape index: {}]
  %s4 = inlined_call_operand.hbm [shape: f32[2,8,128], index: 4, kind: output, shape index: {}]
  %s5 = sld [smem:[#allocation0]]
  $region46: #{tpu_custom_call.1} parent=0
    _
  %s7 = ssub.s32 1, %s5
  %s8 = scalar_select 0, %s7, %s5
  $region1: #{tpu_custom_call.1} parent=0
    #allocation4 [shape = 'u8[8192]{0}', space=vmem, size = 0x2000, scoped, tag = 'input window, operand 0, single buffered']
    #allocation5 [shape = 's32[1]{0}', space=sflag, size = 0x4, scoped, tag = 'scoped memory for tpu_custom_call.1']
    #allocation6 [shape = 's32[1]{0}', space=sflag, size = 0x4, scoped, tag = 'scoped memory for tpu_custom_call.1']
    #allocation7 [shape = 'u8[4096]{0}', space=vmem, size = 0x1000, scoped, tag = 'input window, operand 1, single buffered']
    #allocation8 [shape = 's32[1]{0}', space=sflag, size = 0x4, scoped, tag = 'scoped memory for tpu_custom_call.1']
    #allocation9 [shape = 'u8[32768]{0}', space=vmem, size = 0x8000, scoped, tag = 'input window, operand 2, single buffered']
    #allocation10 [shape = 'u8[8192]{0}', space=vmem, size = 0x2000, scoped, tag = 'output window, operand 0, single buffered']
    %9 = vsyncpa [#allocation5], 0
    %10 = vsyncpa [#allocation8], 0
    %11 = vsyncpa [#allocation6], 0
    // Predicated region
    $region2: #{tpu_custom_call.1} parent=1 // pred_check
      _
    $region3: #{tpu_custom_call.1} parent=1 // pred_check_branch
      %13 = sbr.rel (0) target = $region5
    $region4: #{tpu_custom_call.1} parent=1 // pred_region
      %15 = vsyncadd [#allocation5], 0
      %s16 = sshll.u32 %s0, 4
      %s17 = int_to_ptr.hbm [resolvable:$true] %s16
      %s18 = sshll.u32 [#allocation4], 4
      %s19 = int_to_ptr.vmem [resolvable:$true] %s18
      %24 = dma.hbm_to_vmem [thread:$0]  %s17, 256, %s19, [#allocation5], 128, 128, 8
    $region5: #{tpu_custom_call.1} parent=1 // pred_fallthru
      _
    // Predicated region
    $region6: #{tpu_custom_call.1} parent=1 // pred_check
      _
    $region7: #{tpu_custom_call.1} parent=1 // pred_check_branch
      %26 = sbr.rel (0) target = $region9
    $region8: #{tpu_custom_call.1} parent=1 // pred_region
      %28 = vsyncadd [#allocation8], 0
      %s29 = sshll.u32 %s1, 4
      %s30 = int_to_ptr.hbm [resolvable:$true] %s29
      %s31 = sshll.u32 [#allocation7], 4
      %s32 = int_to_ptr.vmem [resolvable:$true] %s31
      %37 = dma.hbm_to_vmem [thread:$0]  %s30, 128, %s32, [#allocation8], 64, 64, 4
    $region9: #{tpu_custom_call.1} parent=1 // pred_fallthru
      _
    // Predicated region
    $region10: #{tpu_custom_call.1} parent=1 // pred_check
      _
    $region11: #{tpu_custom_call.1} parent=1 // pred_check_branch
      %39 = sbr.rel (0) target = $region13
    $region12: #{tpu_custom_call.1} parent=1 // pred_region
      %41 = vsyncadd [#allocation8], 0
      %s42 = sshll.u32 %s2, 4
      %s43 = int_to_ptr.hbm [resolvable:$true] %s42
      %s44 = sshll.u32 [#allocation9], 4
      %s45 = int_to_ptr.vmem [resolvable:$true] %s44
      %50 = dma.hbm_to_vmem [thread:$0]  %s43, 1024, %s45, [#allocation8], 64, 64, 4
    $region13: #{tpu_custom_call.1} parent=1 // pred_fallthru
      _
    // Predicated region
    $region14: #{tpu_custom_call.1} parent=1 // pred_check
      _
    $region15: #{tpu_custom_call.1} parent=1 // pred_check_branch
      %52 = sbr.rel (0) target = $region17
    $region16: #{tpu_custom_call.1} parent=1 // pred_region
      _
    $region17: #{tpu_custom_call.1} parent=1 // pred_fallthru
      _
    // Predicated region
    $region18: #{tpu_custom_call.1} parent=1 // pred_check
      _
    $region19: #{tpu_custom_call.1} parent=1 // pred_check_branch
      %54 = sbr.rel (0) target = $region21
    $region20: #{tpu_custom_call.1} parent=1 // pred_region
      %56 = dma.done [#allocation5], 256
    $region21: #{tpu_custom_call.1} parent=1 // pred_fallthru
      _
    // Predicated region
    $region22: #{tpu_custom_call.1} parent=1 // pred_check
      _
    $region23: #{tpu_custom_call.1} parent=1 // pred_check_branch
      %58 = sbr.rel (0) target = $region25
    $region24: #{tpu_custom_call.1} parent=1 // pred_region
      %60 = dma.done [#allocation8], 128
    $region25: #{tpu_custom_call.1} parent=1 // pred_fallthru
      _
    // Predicated region
    $region26: #{tpu_custom_call.1} parent=1 // pred_check
      _
    $region27: #{tpu_custom_call.1} parent=1 // pred_check_branch
      %62 = sbr.rel (0) target = $region29
    $region28: #{tpu_custom_call.1} parent=1 // pred_region
      %64 = dma.done [#allocation8], 1024
    $region29: #{tpu_custom_call.1} parent=1 // pred_fallthru
      _
    %p66 = scmp.eq.s32.totalorder 0, 0
    // Predicated region
    $region30: #{tpu_custom_call.1} parent=1 // pred_check
      %p67 = pneg %p66
    $region31: #{tpu_custom_call.1} parent=1 // pred_check_branch
      %69 = sbr.rel (%p67) target = $region33
    $region32: #{tpu_custom_call.1} parent=1 // pred_region
      %70 = vst [vmem:[#allocation2] sm:$0xff] 0.0
      %71 = vst [vmem:[#allocation2 + $0x8] sm:$0xff] 0.0
      %vm72 = vcmask 7168
      %73 = vst.msk [vmem:[#allocation3] sm:$0xff] %vm72, 0.0
      %74 = vst.msk [vmem:[#allocation3 + $0x8] sm:$0xff] %vm72, 0.0
    $region33: #{tpu_custom_call.1} parent=1 // pred_fallthru
      _
    %v75 = vld [vmem:[#allocation4] sm:$0xff]
    %v76 = vld [vmem:[#allocation4 + $0x8] sm:$0xff]
    %v77 = vld [vmem:[#allocation3] sm:$0xff]
    %v78 = vld [vmem:[#allocation3 + $0x8] sm:$0xff]
    %vm79 = vcmask 64512
    %v80 = vsel %vm79, %v75, 0.0
    %81 = vadd.xlane.f32.xlu0 %v80
    %v82 = vpop.xlane.xlu0 %81
    %v83 = vsel %vm79, %v76, 0.0
    %84 = vadd.xlane.f32.xlu0 %v83
    %v85 = vpop.xlane.xlu0 %84
    %v86 = vadd.f32 %v77, %v82
    %v87 = vadd.f32 %v78, %v85
    %vm88 = vcmask 7168
    %89 = vst.msk [vmem:[#allocation3] sm:$0xff] %vm88, %v86
    %90 = vst.msk [vmem:[#allocation3 + $0x8] sm:$0xff] %vm88, %v87
    %v91 = vld [vmem:[#allocation2] sm:$0xff]
    %v92 = vld [vmem:[#allocation2 + $0x8] sm:$0xff]
    %v93 = vpack.c.bf16 %v75, %v75
    %v94 = vpack.c.bf16 %v76, %v76
    %v95 = vld [vmem:[#allocation7] sm:$0xf]
    %v96 = vld [vmem:[#allocation7 + $0x4] sm:$0xf]
    %v98 = vsel %vm79, %v93, 0
    %vm100 = vcmask 1043456
    %v102 = vsel %vm100, %v95, 0
    %104 = vmatpush.bf16.msra.mxu0 0
    %105 = vmatpush.bf16.msra.mxu0 0
    %106 = vmatpush.bf16.msra.mxu0 0
    %107 = vmatpush.bf16.msra.mxu0 0
    %108 = vmatpush.bf16.msra.mxu0 0
    %109 = vmatpush.bf16.msra.mxu0 0
    %110 = vmatpush.bf16.msra.mxu0 0
    %111 = vmatpush.bf16.msra.mxu0 %v102
    %112 = vmatmul.bf16.gmra.mxu0 %v98
    %v113 = vpop.f32.mrf.mxu0
    %v114 = vadd.f32 0.0, %v113
    %v115 = vpop.f32.mrf.mxu0
    %116 = vdwg.mxu0
    %v118 = vsel %vm79, %v94, 0
    %v121 = vsel %vm100, %v96, 0
    %123 = vmatpush.bf16.msra.mxu0 0
    %124 = vmatpush.bf16.msra.mxu0 0
    %125 = vmatpush.bf16.msra.mxu0 0
    %126 = vmatpush.bf16.msra.mxu0 0
    %127 = vmatpush.bf16.msra.mxu0 0
    %128 = vmatpush.bf16.msra.mxu0 0
    %129 = vmatpush.bf16.msra.mxu0 0
    %130 = vmatpush.bf16.msra.mxu0 %v121
    %131 = vmatmul.bf16.gmra.mxu0 %v118
    %v132 = vpop.f32.mrf.mxu0
    %v133 = vadd.f32 0.0, %v132
    %v134 = vpop.f32.mrf.mxu0
    %135 = vdwg.mxu0
    %v136 = vadd.f32 %v91, %v114
    %v137 = vadd.f32 %v92, %v133
    %138 = vst [vmem:[#allocation2] sm:$0xff] %v136
    %139 = vst [vmem:[#allocation2 + $0x8] sm:$0xff] %v137
    // Predicated region
    $region34: #{tpu_custom_call.1} parent=1 // pred_check
      %p140 = pneg %p66
    $region35: #{tpu_custom_call.1} parent=1 // pred_check_branch
      %142 = sbr.rel (%p140) target = $region37
    $region36: #{tpu_custom_call.1} parent=1 // pred_region
      %v143 = vld [vmem:[#allocation3] sm:$0xff]
      %v144 = vld [vmem:[#allocation3 + $0x8] sm:$0xff]
      %vm145 = vcmp.eq.f32.partialorder %v143, 0.0
      %vm146 = vcmp.eq.f32.partialorder %v144, 0.0
      %v147 = vsel %vm145, 1.0, %v143
      %v148 = vsel %vm146, 1.0, %v144
      %v149 = vrcp.pop %v147
      %v150 = vrcp.pop %v148
      %v151 = vld [vmem:[#allocation2] sm:$0xff]
      %v152 = vld [vmem:[#allocation2 + $0x8] sm:$0xff]
      %154 = vset.pattern.permute.xlu0 0
      %155 = vperm.xlu0 %154, %v149
      %v156 = vpop.permute.xlu0 %155
      %159 = vset.pattern.permute.xlu0 0
      %160 = vperm.xlu0 %159, %v150
      %v161 = vpop.permute.xlu0 %160
      %v163 = vmul.f32 %v151, %v156
      %v164 = vmul.f32 %v152, %v161
      %v165 = vpack.c.bf16 %v164, %v163
      %v166 = vld [vmem:[#allocation9] sm:$0xf]
      %v167 = vld [vmem:[#allocation9 + $0x4] sm:$0xf]
      %v168 = vld [vmem:[#allocation9 + $0x8] sm:$0xf]
      %v169 = vld [vmem:[#allocation9 + $0xc] sm:$0xf]
      %v170 = vld [vmem:[#allocation9 + $0x10] sm:$0xf]
      %v171 = vld [vmem:[#allocation9 + $0x14] sm:$0xf]
      %v172 = vld [vmem:[#allocation9 + $0x18] sm:$0xf]
      %v173 = vld [vmem:[#allocation9 + $0x1c] sm:$0xf]
      %v174 = vld [vmem:[#allocation9 + $0x20] sm:$0xf]
      %v175 = vld [vmem:[#allocation9 + $0x24] sm:$0xf]
      %v176 = vld [vmem:[#allocation9 + $0x28] sm:$0xf]
      %v177 = vld [vmem:[#allocation9 + $0x2c] sm:$0xf]
      %v178 = vld [vmem:[#allocation9 + $0x30] sm:$0xf]
      %v179 = vld [vmem:[#allocation9 + $0x34] sm:$0xf]
      %v180 = vld [vmem:[#allocation9 + $0x38] sm:$0xf]
      %v181 = vld [vmem:[#allocation9 + $0x3c] sm:$0xf]
      %v182 = vld [vmem:[%s3] sm:$0x1]
      %v184 = vperm.slane %v182, 0
      %v202 = vunpack.c.l.b16 %v166
      %v203 = vunpack.c.l.b16 %v167
      %v204 = vunpack.c.l.b16 %v168
      %v205 = vunpack.c.l.b16 %v169
      %v206 = vunpack.c.l.b16 %v170
      %v207 = vunpack.c.l.b16 %v171
      %v208 = vunpack.c.l.b16 %v172
      %v209 = vunpack.c.l.b16 %v173
      %v210 = vunpack.c.l.b16 %v174
      %v211 = vunpack.c.l.b16 %v175
      %v212 = vunpack.c.l.b16 %v176
      %v213 = vunpack.c.l.b16 %v177
      %v214 = vunpack.c.l.b16 %v178
      %v215 = vunpack.c.l.b16 %v179
      %v216 = vunpack.c.l.b16 %v180
      %v217 = vunpack.c.l.b16 %v181
      %v218 = vpack.c.b16 %v203, %v202
      %v219 = vpack.c.b16 %v205, %v204
      %v220 = vpack.c.b16 %v207, %v206
      %v221 = vpack.c.b16 %v209, %v208
      %v222 = vpack.c.b16 %v211, %v210
      %v223 = vpack.c.b16 %v213, %v212
      %v224 = vpack.c.b16 %v215, %v214
      %v225 = vpack.c.b16 %v217, %v216
      %234 = vmatpush.bf16.msra.mxu0 %v225
      %235 = vmatpush.bf16.msra.mxu0 %v224
      %236 = vmatpush.bf16.msra.mxu0 %v223
      %237 = vmatpush.bf16.msra.mxu0 %v222
      %238 = vmatpush.bf16.msra.mxu0 %v221
      %239 = vmatpush.bf16.msra.mxu0 %v220
      %240 = vmatpush.bf16.msra.mxu0 %v219
      %241 = vmatpush.bf16.msra.mxu0 %v218
      %242 = vmatmul.bf16.gmra.mxu0 %v165
      %v243 = vpop.f32.mrf.mxu0
      %v244 = vadd.f32 %v184, %v243
      %v245 = vpop.f32.mrf.mxu0
      %v246 = vadd.f32 %v184, %v245
      %247 = vdwg.mxu0
      %v248 = vmax.f32 %v244, 0.0
      %v249 = vmax.f32 %v246, 0.0
      %250 = vst [vmem:[#allocation10] sm:$0xff] %v248
      %251 = vst [vmem:[#allocation10 + $0x8] sm:$0xff] %v249
    $region37: #{tpu_custom_call.1} parent=1 // pred_fallthru
      _
    // Predicated region
    $region38: #{tpu_custom_call.1} parent=1 // pred_check
      _
    $region39: #{tpu_custom_call.1} parent=1 // pred_check_branch
      %253 = sbr.rel (0) target = $region41
    $region40: #{tpu_custom_call.1} parent=1 // pred_region
      %255 = vsyncadd [#allocation6], 0
      %s256 = sshll.u32 [#allocation10], 4
      %s257 = int_to_ptr.vmem [resolvable:$true] %s256
      %s258 = sshll.u32 %s4, 4
      %s259 = int_to_ptr.hbm [resolvable:$true] %s258
      %264 = dma.vmem_to_hbm [thread:$0]  %s257, 256, %s259, [#allocation6], 128, 128, 8
    $region41: #{tpu_custom_call.1} parent=1 // pred_fallthru
      _
    // Predicated region
    $region42: #{tpu_custom_call.1} parent=1 // pred_check
      _
    $region43: #{tpu_custom_call.1} parent=1 // pred_check_branch
      %266 = sbr.rel (0) target = $region45
    $region44: #{tpu_custom_call.1} parent=1 // pred_region
      %268 = dma.done [#allocation6], 256
    $region45: #{tpu_custom_call.1} parent=1 // pred_fallthru
      _
    %269 = vsyncpa [#allocation5], 1
    %270 = vsyncpa [#allocation8], 1
    %271 = vsyncpa [#allocation6], 1

</llo_original>
